<compile_context>
chip_gen: v7x
topology: tpu7x:2x2x1
jax: 0.10.0
libtpu: 0.0.40
codegen_flags: <defaults>
</compile_context>

<pallas_src>
import numpy as np
import jax
import jax.numpy as jnp
from jax.experimental import pallas as pl
from jax.experimental.pallas import tpu as pltpu


def _interp_matrix(in_size: int, out_size: int) -> np.ndarray:
    """Row-interpolation matrix matching torch F.interpolate(bilinear, align_corners=False)."""
    scale = in_size / out_size
    o = np.arange(out_size, dtype=np.float64)
    src = (o + 0.5) * scale - 0.5
    src = np.maximum(src, 0.0)                       # torch clamps source index at 0
    i0 = np.minimum(np.floor(src).astype(np.int64), in_size - 1)
    i1 = np.minimum(i0 + 1, in_size - 1)
    frac = src - i0
    w = np.zeros((out_size, in_size), dtype=np.float64)
    w[np.arange(out_size), i0] += 1.0 - frac
    w[np.arange(out_size), i1] += frac
    return w


def _round_up(x: int, m: int) -> int:
    return (x + m - 1) // m * m


def ssd_fast_base_transform(img_nhwc, means, std):
    n, h, w, c = img_nhwc.shape
    assert c == 3, "SSD transform expects 3-channel images"
    h_out, w_out = int(h * 1.125), int(w * 1.125)
    w_pad = _round_up(w_out, 128)                    # lane-dense output width

    means_np = np.asarray(means, dtype=np.float64)
    inv_std = 1.0 / np.asarray(std, dtype=np.float64)

    # Width-interpolation matrix fused with:
    #   * de-interleave of the NHWC slab (K axis runs over q*3 + ch)
    #   * RGB -> BGR output-channel flip (channel blocks along lanes)
    #   * the 1/std scale of the normalization.
    ww = _interp_matrix(w, w_out)                    # (w_out, w)
    w_big = np.zeros((w * 3, 3 * w_pad), dtype=np.float32)
    bias = np.zeros((3,), dtype=np.float32)
    for c_out in range(3):
        c_in = 2 - c_out                             # BGR flip
        w_big[c_in::3, c_out * w_pad:c_out * w_pad + w_out] = (
            ww.T * inv_std[c_in]).astype(np.float32)
        bias[c_out] = np.float32(-means_np[c_in] * inv_std[c_in])
    wh = _interp_matrix(h, h_out).astype(np.float32)  # (h_out, h)

    def kernel(x_ref, wbig_ref, wh_ref, out_ref):
        # One image as a channel-interleaved (h, w*3) slab; cast in-kernel.
        x = x_ref[...].astype(jnp.float32)
        # Width interp + de-interleave + BGR flip + 1/std in one MXU pass:
        # (h, 3w) @ (3w, 3*w_pad) -> (h, 3*w_pad), channel-blocked along lanes.
        # (Use precision=jax.lax.Precision.HIGHEST here if exact bit-parity
        #  with torch's lerp is required.)
        y = jnp.dot(x, wbig_ref[...], preferred_element_type=jnp.float32)
        whm = wh_ref[...]
        for co in range(3):                          # static, unrolled
            yc = y[:, co * w_pad:(co + 1) * w_pad]   # lane-aligned static view
            oc = jnp.dot(whm, yc, preferred_element_type=jnp.float32)
            out_ref[co] = oc + float(bias[co])       # -mean/std bias (no divide)

    # Free reshape: collapsing the two trailing contiguous dims, no transpose.
    img_slab = jnp.reshape(img_nhwc, (n, h, w * 3))

    out = pl.pallas_call(
        kernel,
        out_shape=jax.ShapeDtypeStruct((n, 3, h_out, w_pad), jnp.float32),
        grid=(n,),
        in_specs=[
            pl.BlockSpec((None, h, w * 3), lambda i: (i, 0, 0)),     # image slab
            pl.BlockSpec((w * 3, 3 * w_pad), lambda i: (0, 0)),      # fused width weights
            pl.BlockSpec((h_out, h), lambda i: (0, 0)),              # height weights
        ],
        out_specs=pl.BlockSpec((None, 3, h_out, w_pad), lambda i: (i, 0, 0, 0)),
        compiler_params=pltpu.CompilerParams(
            dimension_semantics=("parallel",),       # batch images on separate TCs (v7x)
            vmem_limit_bytes=64 * 1024 * 1024,
        ),
    )(img_slab, jnp.asarray(w_big), jnp.asarray(wh))

    # Strip the lane padding; kernel stores stay unmasked / lane-dense.
    return out[..., :w_out]


if __name__ == "__main__":
    # Deterministic "weights" of the module: MEANS / STD (yolact defaults).
    MEANS = (103.94, 116.78, 123.68)
    STD = (57.38, 57.12, 58.40)

    key = jax.random.PRNGKey(0)
    # NHWC input, like the PyTorch forward expects: batch=2, 16x16, 3 channels.
    img = jax.random.uniform(key, (2, 16, 16, 3), dtype=jnp.float32,
                             minval=0.0, maxval=255.0)

    out = ssd_fast_base_transform(img, MEANS, STD)
    out = jax.block_until_ready(out)
    assert out.shape == (2, 3, 18, 18), out.shape
    assert out.dtype == jnp.float32
    print("KERNEL_OK")
</pallas_src>

<mosaic_0001>
module attributes {stable_mosaic.version = 11 : i64} {
  func.func @kernel(%arg0: i32, %arg1: memref<1x16x48xf32, #tpu.memory_space<vmem>>, %arg2: memref<48x384xf32, #tpu.memory_space<vmem>>, %arg3: memref<18x16xf32, #tpu.memory_space<vmem>>, %arg4: memref<1x3x18x128xf32, #tpu.memory_space<vmem>>) attributes {dimension_semantics = [#tpu.dimension_semantics<parallel>], iteration_bounds = array<i64: 2>, scalar_prefetch = 0 : i64, scratch_operands = 0 : i64, tpu.core_type = #tpu.core_type<tc>, window_params = [{transform_indices = @transform_0, window_bounds = array<i64: 1, 16, 48>}, {pipeline_mode = #tpu.pipeline_mode<synchronous>, transform_indices = @transform_1, window_bounds = array<i64: 48, 384>}, {pipeline_mode = #tpu.pipeline_mode<synchronous>, transform_indices = @transform_2, window_bounds = array<i64: 18, 16>}, {transform_indices = @transform_3, window_bounds = array<i64: 1, 3, 18, 128>}]} {
    %c0 = arith.constant 0 : index
    %c0_0 = arith.constant 0 : index
    %c0_1 = arith.constant 0 : index
    %0 = vector.load %arg1[%c0, %c0_0, %c0_1] : memref<1x16x48xf32, #tpu.memory_space<vmem>>, vector<1x16x48xf32>
    %1 = vector.shape_cast %0 : vector<1x16x48xf32> to vector<16x48xf32>
    %c0_2 = arith.constant 0 : index
    %c0_3 = arith.constant 0 : index
    %2 = vector.load %arg2[%c0_2, %c0_3] : memref<48x384xf32, #tpu.memory_space<vmem>>, vector<48x384xf32>
    %cst = arith.constant dense<0.000000e+00> : vector<16x384xf32>
    %3 = tpu.matmul %1, %2, %cst {dimension_numbers = #tpu.dot_dimension_numbers<[1], [0], [0], [1], [0, 0, 1, 1], [], []>} : vector<16x48xf32>, vector<48x384xf32>, vector<16x384xf32> -> vector<16x384xf32>
    %c0_4 = arith.constant 0 : index
    %c0_5 = arith.constant 0 : index
    %4 = vector.load %arg3[%c0_4, %c0_5] : memref<18x16xf32, #tpu.memory_space<vmem>>, vector<18x16xf32>
    %5 = vector.extract_strided_slice %3 {offsets = [0, 0], sizes = [16, 128], strides = [1, 1]} : vector<16x384xf32> to vector<16x128xf32>
    %cst_6 = arith.constant dense<0.000000e+00> : vector<18x128xf32>
    %6 = tpu.matmul %4, %5, %cst_6 {dimension_numbers = #tpu.dot_dimension_numbers<[1], [0], [0], [1], [0, 0, 1, 1], [], []>} : vector<18x16xf32>, vector<16x128xf32>, vector<18x128xf32> -> vector<18x128xf32>
    %cst_7 = arith.constant -2.1178081 : f32
    %7 = vector.broadcast %cst_7 : f32 to vector<18x128xf32>
    %8 = arith.addf %6, %7 : vector<18x128xf32>
    %c0_8 = arith.constant 0 : index
    %c0_9 = arith.constant 0 : index
    %c0_10 = arith.constant 0 : index
    %c0_11 = arith.constant 0 : index
    %9 = vector.load %arg4[%c0_8, %c0_9, %c0_10, %c0_11] : memref<1x3x18x128xf32, #tpu.memory_space<vmem>>, vector<1x1x18x128xf32>
    %10 = vector.shape_cast %9 : vector<1x1x18x128xf32> to vector<18x128xf32>
    %11 = vector.shape_cast %8 : vector<18x128xf32> to vector<1x1x18x128xf32>
    tpu.vector_store %arg4[%c0_8, %c0_9, %c0_10, %c0_11], %11 {strides = array<i32>} : memref<1x3x18x128xf32, #tpu.memory_space<vmem>>, vector<1x1x18x128xf32>,
    %12 = vector.extract_strided_slice %3 {offsets = [0, 128], sizes = [16, 128], strides = [1, 1]} : vector<16x384xf32> to vector<16x128xf32>
    %cst_12 = arith.constant dense<0.000000e+00> : vector<18x128xf32>
    %13 = tpu.matmul %4, %12, %cst_12 {dimension_numbers = #tpu.dot_dimension_numbers<[1], [0], [0], [1], [0, 0, 1, 1], [], []>} : vector<18x16xf32>, vector<16x128xf32>, vector<18x128xf32> -> vector<18x128xf32>
    %cst_13 = arith.constant -2.04446769 : f32
    %14 = vector.broadcast %cst_13 : f32 to vector<18x128xf32>
    %15 = arith.addf %13, %14 : vector<18x128xf32>
    %c0_14 = arith.constant 0 : index
    %c1 = arith.constant 1 : index
    %c0_15 = arith.constant 0 : index
    %c0_16 = arith.constant 0 : index
    %16 = vector.load %arg4[%c0_14, %c1, %c0_15, %c0_16] : memref<1x3x18x128xf32, #tpu.memory_space<vmem>>, vector<1x1x18x128xf32>
    %17 = vector.shape_cast %16 : vector<1x1x18x128xf32> to vector<18x128xf32>
    %18 = vector.shape_cast %15 : vector<18x128xf32> to vector<1x1x18x128xf32>
    tpu.vector_store %arg4[%c0_14, %c1, %c0_15, %c0_16], %18 {strides = array<i32>} : memref<1x3x18x128xf32, #tpu.memory_space<vmem>>, vector<1x1x18x128xf32>,
    %19 = vector.extract_strided_slice %3 {offsets = [0, 256], sizes = [16, 128], strides = [1, 1]} : vector<16x384xf32> to vector<16x128xf32>
    %cst_17 = arith.constant dense<0.000000e+00> : vector<18x128xf32>
    %20 = tpu.matmul %4, %19, %cst_17 {dimension_numbers = #tpu.dot_dimension_numbers<[1], [0], [0], [1], [0, 0, 1, 1], [], []>} : vector<18x16xf32>, vector<16x128xf32>, vector<18x128xf32> -> vector<18x128xf32>
    %cst_18 = arith.constant -1.8114326 : f32
    %21 = vector.broadcast %cst_18 : f32 to vector<18x128xf32>
    %22 = arith.addf %20, %21 : vector<18x128xf32>
    %c0_19 = arith.constant 0 : index
    %c2 = arith.constant 2 : index
    %c0_20 = arith.constant 0 : index
    %c0_21 = arith.constant 0 : index
    %23 = vector.load %arg4[%c0_19, %c2, %c0_20, %c0_21] : memref<1x3x18x128xf32, #tpu.memory_space<vmem>>, vector<1x1x18x128xf32>
    %24 = vector.shape_cast %23 : vector<1x1x18x128xf32> to vector<18x128xf32>
    %25 = vector.shape_cast %22 : vector<18x128xf32> to vector<1x1x18x128xf32>
    tpu.vector_store %arg4[%c0_19, %c2, %c0_20, %c0_21], %25 {strides = array<i32>} : memref<1x3x18x128xf32, #tpu.memory_space<vmem>>, vector<1x1x18x128xf32>,
    return
  }
  func.func @transform_0(%arg0: i32) -> (i32, i32, i32) {
    %c0_i32 = arith.constant 0 : i32
    %c0_i32_0 = arith.constant 0 : i32
    %c0_i32_1 = arith.constant 0 : i32
    return %arg0, %c0_i32, %c0_i32_0 : i32, i32, i32
  }
  func.func @transform_1(%arg0: i32) -> (i32, i32) {
    %c0_i32 = arith.constant 0 : i32
    %c0_i32_0 = arith.constant 0 : i32
    %c0_i32_1 = arith.constant 0 : i32
    return %c0_i32, %c0_i32_0 : i32, i32
  }
  func.func @transform_2(%arg0: i32) -> (i32, i32) {
    %c0_i32 = arith.constant 0 : i32
    %c0_i32_0 = arith.constant 0 : i32
    %c0_i32_1 = arith.constant 0 : i32
    return %c0_i32, %c0_i32_0 : i32, i32
  }
  func.func @transform_3(%arg0: i32) -> (i32, i32, i32, i32) {
    %c0_i32 = arith.constant 0 : i32
    %c0_i32_0 = arith.constant 0 : i32
    %c0_i32_1 = arith.constant 0 : i32
    %c0_i32_2 = arith.constant 0 : i32
    return %arg0, %c0_i32, %c0_i32_0, %c0_i32_1 : i32, i32, i32, i32
  }
}

</mosaic_0001>

<llo_original>
// kernel: tpu_custom_call.1
$region0: #{tpu_custom_call.1}
  #allocation0 [shape = 'u32[]', space=smem, size = 0x4, offset = 0x4, fixed_abs, tag = 'smem constant byte address 0x4 - core index']
  #allocation1 [shape = 'u32[144,128]{1,0:T(1,128)}', space=vmem, size = 0x12000, scoped, tag = 'internal scratch']
  %s0 = inlined_call_operand.hbm [shape: f32[2,16,48], index: 0, kind: input, shape index: {}]
  %s1 = inlined_call_operand.hbm [shape: f32[48,384], index: 1, kind: input, shape index: {}]
  %s2 = inlined_call_operand.hbm [shape: f32[18,16], index: 2, kind: input, shape index: {}]
  %s3 = inlined_call_operand.hbm [shape: f32[2,3,18,128], index: 3, kind: output, shape index: {}]
  %s4 = sld [smem:[#allocation0]]
  $region57: #{tpu_custom_call.1} parent=0
    _
  %s6 = ssub.s32 1, %s4
  %s7 = scalar_select 0, %s6, %s4
  $region1: #{tpu_custom_call.1} parent=0
    #allocation2 [shape = 'u8[16384]{0}', space=vmem, size = 0x4000, scoped, tag = 'input window, operand 0']
    #allocation3 [shape = 's32[2]{0}', space=sflag, size = 0x8, scoped, tag = 'scoped memory for tpu_custom_call.1']
    #allocation4 [shape = 's32[2]{0}', space=sflag, size = 0x8, scoped, tag = 'scoped memory for tpu_custom_call.1']
    #allocation5 [shape = 'u8[73728]{0}', space=vmem, size = 0x12000, scoped, tag = 'input window, operand 1, single buffered']
    #allocation6 [shape = 's32[1]{0}', space=sflag, size = 0x4, scoped, tag = 'scoped memory for tpu_custom_call.1']
    #allocation7 [shape = 'u8[12288]{0}', space=vmem, size = 0x3000, scoped, tag = 'input window, operand 2, single buffered']
    #allocation8 [shape = 'u8[73728]{0}', space=vmem, size = 0x12000, scoped, tag = 'output window, operand 0']
    %8 = vsyncpa [#allocation3], 0
    %s9 = scalar_lea.sflag [#allocation3], 1
    %10 = vsyncpa %s9, 0
    %11 = vsyncpa [#allocation6], 0
    %12 = vsyncpa [#allocation4], 0
    %s13 = scalar_lea.sflag [#allocation4], 1
    %14 = vsyncpa %s13, 0
    loop: start=0, step=1, limit=4
    $region2: #{tpu_custom_call.1} parent=1 // loop_pre_header
      _
    $region3: #{tpu_custom_call.1} parent=1 // loop_header
      %s16 = sphi 0, %s20
      %p17 = scmp.ge.s32.totalorder %s16, 4
      %s26 = sphi 0, %s28
      %s29 = sphi 0, %s26
      %s30 = sphi 0, %s29
      %s46 = sphi 0, %s30
      %s50 = sphi 0, %s50
      %s52 = sphi 0, %s50
      %s53 = sphi 0, %s52
      %s67 = sphi 0, %s53
      %s71 = sphi 0, %s71
      %s73 = sphi 0, %s71
      %s74 = sphi 0, %s73
      %s88 = sphi 0, %s74
      %s94 = sphi 0, %s96
      %s97 = sphi 0, %s94
      %s98 = sphi 0, %s97
      %s114 = sphi 0, %s98
    $region4: #{tpu_custom_call.1} parent=1 // loop_header_branch
      %19 = sbr.rel (%p17) target = $region8
    $region5: #{tpu_custom_call.1} parent=1 // loop_body
      %s21 = ssub.s32 %s16, 1
      %s22 = ssub.s32 %s16, 2
      %s23 = sadd.s32 %s16, 1
      %s24 = ssub.s32 %s16, %s23
      %p25 = scmp.eq.s32.totalorder %s24, 0
      %s27 = sadd.s32 %s26, 1
      %s28 = scalar_select %p25, %s26, %s27
      %p31 = pneg %p25
      %p32 = scmp.eq.s32.totalorder %s16, 1
      %p33 = por %p31, %p32
      %p34 = scmp.ne.s32.totalorder %s26, %s29
      %p35 = scmp.eq.s32.totalorder %s16, 0
      %p36 = por %p34, %p35
      %p37 = scmp.ne.s32.totalorder %s26, %s29
      %p38 = scmp.eq.s32.totalorder %s21, 1
      %p39 = por %p37, %p38
      %p40 = scmp.ne.s32.totalorder %s29, %s30
      %p41 = scmp.eq.s32.totalorder %s21, 0
      %p42 = por %p40, %p41
      %p43 = scmp.ne.s32.totalorder %s29, %s30
      %p44 = scmp.eq.s32.totalorder %s22, 1
      %p45 = por %p43, %p44
      %p47 = scmp.ne.s32.totalorder %s30, %s46
      %p48 = scmp.eq.s32.totalorder %s22, 0
      %p49 = por %p47, %p48
      %s51 = sadd.s32 %s50, 1
      %p54 = scmp.eq.s32.totalorder %s16, 1
      %p55 = scmp.ne.s32.totalorder %s50, %s52
      %p56 = scmp.eq.s32.totalorder %s16, 0
      %p57 = por %p55, %p56
      %p58 = scmp.ne.s32.totalorder %s50, %s52
      %p59 = scmp.eq.s32.totalorder %s21, 1
      %p60 = por %p58, %p59
      %p61 = scmp.ne.s32.totalorder %s52, %s53
      %p62 = scmp.eq.s32.totalorder %s21, 0
      %p63 = por %p61, %p62
      %p64 = scmp.ne.s32.totalorder %s52, %s53
      %p65 = scmp.eq.s32.totalorder %s22, 1
      %p66 = por %p64, %p65
      %p68 = scmp.ne.s32.totalorder %s53, %s67
      %p69 = scmp.eq.s32.totalorder %s22, 0
      %p70 = por %p68, %p69
      %s72 = sadd.s32 %s71, 1
      %p75 = scmp.eq.s32.totalorder %s16, 1
      %p76 = scmp.ne.s32.totalorder %s71, %s73
      %p77 = scmp.eq.s32.totalorder %s16, 0
      %p78 = por %p76, %p77
      %p79 = scmp.ne.s32.totalorder %s71, %s73
      %p80 = scmp.eq.s32.totalorder %s21, 1
      %p81 = por %p79, %p80
      %p82 = scmp.ne.s32.totalorder %s73, %s74
      %p83 = scmp.eq.s32.totalorder %s21, 0
      %p84 = por %p82, %p83
      %p85 = scmp.ne.s32.totalorder %s73, %s74
      %p86 = scmp.eq.s32.totalorder %s22, 1
      %p87 = por %p85, %p86
      %p89 = scmp.ne.s32.totalorder %s74, %s88
      %p90 = scmp.eq.s32.totalorder %s22, 0
      %p91 = por %p89, %p90
      %s92 = ssub.s32 %s16, %s23
      %p93 = scmp.eq.s32.totalorder %s92, 0
      %s95 = sadd.s32 %s94, 1
      %s96 = scalar_select %p93, %s94, %s95
      %p99 = pneg %p93
      %p100 = scmp.eq.s32.totalorder %s16, 1
      %p101 = por %p99, %p100
      %p102 = scmp.ne.s32.totalorder %s94, %s97
      %p103 = scmp.eq.s32.totalorder %s16, 0
      %p104 = por %p102, %p103
      %p105 = scmp.ne.s32.totalorder %s94, %s97
      %p106 = scmp.eq.s32.totalorder %s21, 1
      %p107 = por %p105, %p106
      %p108 = scmp.ne.s32.totalorder %s97, %s98
      %p109 = scmp.eq.s32.totalorder %s21, 0
      %p110 = por %p108, %p109
      %p111 = scmp.ne.s32.totalorder %s97, %s98
      %p112 = scmp.eq.s32.totalorder %s22, 1
      %p113 = por %p111, %p112
      %p115 = scmp.ne.s32.totalorder %s98, %s114
      %p116 = scmp.eq.s32.totalorder %s22, 0
      %p117 = por %p115, %p116
      %p118 = scmp.le.s32.totalorder 1, %s16
      %p119 = scmp.lt.s32.totalorder %s16, 3
      %p120 = pnand %p118, %p119
      %p121 = pneg %p120
      // Predicated region
      $region9: #{tpu_custom_call.1} parent=5 // pred_check
        _
      $region10: #{tpu_custom_call.1} parent=5 // pred_check_branch
        %123 = sbr.rel (%p120) target = $region12
      $region11: #{tpu_custom_call.1} parent=5 // pred_region
        %s124 = ssub.s32 %s16, 1
        // Predicated region
        $region13: #{tpu_custom_call.1} parent=11 // pred_check
          %p125 = pneg %p63
        $region14: #{tpu_custom_call.1} parent=11 // pred_check_branch
          %127 = sbr.rel (%p125) target = $region16
        $region15: #{tpu_custom_call.1} parent=11 // pred_region
          %s129 = ssub.s32 2304, 2304
          %130 = vsyncadd [#allocation6], %s129
          %s131 = sshll.u32 [#allocation5], 4
          %s132 = int_to_ptr.vmem [resolvable:$true] %s131
          %137 = dma.hbm_to_vmem [thread:$0]  %s1, 2304, %s132, [#allocation6], 384, 384, 24
        $region16: #{tpu_custom_call.1} parent=11 // pred_fallthru
          _
        // Predicated region
        $region17: #{tpu_custom_call.1} parent=11 // pred_check
          %p138 = pneg %p84
        $region18: #{tpu_custom_call.1} parent=11 // pred_check_branch
          %140 = sbr.rel (%p138) target = $region20
        $region19: #{tpu_custom_call.1} parent=11 // pred_region
          %s142 = ssub.s32 384, 384
          %143 = vsyncadd [#allocation6], %s142
          %s144 = sshll.u32 [#allocation7], 4
          %s145 = int_to_ptr.vmem [resolvable:$true] %s144
          %150 = dma.hbm_to_vmem [thread:$0]  %s2, 384, %s145, [#allocation6], 128, 128, 8
        $region20: #{tpu_custom_call.1} parent=11 // pred_fallthru
          _
      $region12: #{tpu_custom_call.1} parent=5 // pred_fallthru
        _
      %p151 = scmp.lt.s32.totalorder %s16, 2
      // Predicated region
      $region21: #{tpu_custom_call.1} parent=5 // pred_check
        %p152 = pneg %p151
      $region22: #{tpu_custom_call.1} parent=5 // pred_check_branch
        %154 = sbr.rel (%p152) target = $region24
      $region23: #{tpu_custom_call.1} parent=5 // pred_region
        // Predicated region
        $region25: #{tpu_custom_call.1} parent=23 // pred_check
          %p155 = pneg %p36
        $region26: #{tpu_custom_call.1} parent=23 // pred_check_branch
          %157 = sbr.rel (%p155) target = $region28
        $region27: #{tpu_custom_call.1} parent=23 // pred_region
          %s158 = sand.u32 %s26, 1
          %s159 = scalar_lea.sflag [#allocation3], %s158
          %s160 = sand.u32 %s26, 1
          %s161 = smul.addr %s160, 16
          %s162 = scalar_lea.vmem [#allocation2], %s161
          %s164 = ssub.s32 256, 256
          %165 = vsyncadd %s159, %s164
          %s166 = smul.addr %s16, 2
          %s167 = smul.addr %s166, 128
          %s168 = scalar_lea.hbm %s0, %s167
          %s169 = sshll.u32 %s162, 4
          %s170 = int_to_ptr.vmem [resolvable:$true] %s169
          %175 = dma.hbm_to_vmem [thread:$0]  %s168, 256, %s170, %s159, 128, 128, 8
        $region28: #{tpu_custom_call.1} parent=23 // pred_fallthru
          _
      $region24: #{tpu_custom_call.1} parent=5 // pred_fallthru
        _
      %p176 = scmp.le.s32.totalorder 1, %s16
      %p177 = scmp.lt.s32.totalorder %s16, 3
      %p178 = pnand %p176, %p177
      %p179 = pneg %p178
      // Predicated region
      $region29: #{tpu_custom_call.1} parent=5 // pred_check
        _
      $region30: #{tpu_custom_call.1} parent=5 // pred_check_branch
        %181 = sbr.rel (%p178) target = $region32
      $region31: #{tpu_custom_call.1} parent=5 // pred_region
        %s182 = ssub.s32 %s16, 1
        %s183 = sand.u32 %s29, 1
        %s184 = scalar_lea.sflag [#allocation3], %s183
        %s185 = sand.u32 %s29, 1
        %s186 = smul.addr %s185, 16
        %s187 = scalar_lea.vmem [#allocation2], %s186
        // Predicated region
        $region33: #{tpu_custom_call.1} parent=31 // pred_check
          %p188 = pneg %p42
        $region34: #{tpu_custom_call.1} parent=31 // pred_check_branch
          %190 = sbr.rel (%p188) target = $region36
        $region35: #{tpu_custom_call.1} parent=31 // pred_region
          %191 = dma.done %s184, 256
        $region36: #{tpu_custom_call.1} parent=31 // pred_fallthru
          _
        // Predicated region
        $region37: #{tpu_custom_call.1} parent=31 // pred_check
          %p192 = pneg %p63
        $region38: #{tpu_custom_call.1} parent=31 // pred_check_branch
          %194 = sbr.rel (%p192) target = $region40
        $region39: #{tpu_custom_call.1} parent=31 // pred_region
          %195 = dma.done [#allocation6], 2304
        $region40: #{tpu_custom_call.1} parent=31 // pred_fallthru
          _
        // Predicated region
        $region41: #{tpu_custom_call.1} parent=31 // pred_check
          %p196 = pneg %p84
        $region42: #{tpu_custom_call.1} parent=31 // pred_check_branch
          %198 = sbr.rel (%p196) target = $region44
        $region43: #{tpu_custom_call.1} parent=31 // pred_region
          %199 = dma.done [#allocation6], 384
        $region44: #{tpu_custom_call.1} parent=31 // pred_fallthru
          _
        %s200 = sand.u32 %s29, 1
        %s201 = scalar_lea.sflag [#allocation3], %s200
        %s202 = sand.u32 %s29, 1
        %s203 = smul.addr %s202, 16
        %s204 = scalar_lea.vmem [#allocation2], %s203
        %p205 = pneg %p42
        %p206 = pneg %p39
        %p207 = pneg %p63
        %p208 = pneg %p60
        %p209 = pneg %p84
        %p210 = pneg %p81
        %p211 = pneg %p110
        %p212 = pneg %p107
        %s213 = sand.u32 %s97, 1
        %s214 = scalar_lea.sflag [#allocation4], %s213
        %s215 = sand.u32 %s97, 1
        %s216 = smul.addr %s215, 72
        %s217 = scalar_lea.vmem [#allocation8], %s216
        %v218 = vld [vmem:[%s187] sm:$0xff]
        %v219 = vld [vmem:[%s187 + $0x8] sm:$0xff]
        %v220 = vld [vmem:[#allocation5] sm:$0xff]
        %v221 = vld [vmem:[#allocation5 + $0x8] sm:$0xff]
        %v222 = vld [vmem:[#allocation5 + $0x10] sm:$0xff]
        %v223 = vld [vmem:[#allocation5 + $0x18] sm:$0xff]
        %v224 = vld [vmem:[#allocation5 + $0x20] sm:$0xff]
        %v225 = vld [vmem:[#allocation5 + $0x28] sm:$0xff]
        %v226 = vld [vmem:[#allocation5 + $0x30] sm:$0xff]
        %v227 = vld [vmem:[#allocation5 + $0x38] sm:$0xff]
        %v228 = vld [vmem:[#allocation5 + $0x40] sm:$0xff]
        %v229 = vld [vmem:[#allocation5 + $0x48] sm:$0xff]
        %v230 = vld [vmem:[#allocation5 + $0x50] sm:$0xff]
        %v231 = vld [vmem:[#allocation5 + $0x58] sm:$0xff]
        %v232 = vld [vmem:[#allocation5 + $0x60] sm:$0xff]
        %v233 = vld [vmem:[#allocation5 + $0x68] sm:$0xff]
        %v234 = vld [vmem:[#allocation5 + $0x70] sm:$0xff]
        %v235 = vld [vmem:[#allocation5 + $0x78] sm:$0xff]
        %v236 = vld [vmem:[#allocation5 + $0x80] sm:$0xff]
        %v237 = vld [vmem:[#allocation5 + $0x88] sm:$0xff]
        %vm238 = vcmask 392192
        %v240 = vsel %vm238, %v218, 0
        %v243 = vsel %vm238, %v219, 0
        %245 = vmatprep.subr.mxu0 %v221
        %246 = vmatpush1.msra.mxu0 %v220
        %247 = vmatprep.subr.mxu0 %v224
        %248 = vmatpush1.msra.mxu0 %v223
        %249 = vmatprep.subr.mxu0 %v227
        %250 = vmatpush1.msra.mxu0 %v226
        %251 = vmatprep.subr.mxu0 %v230
        %252 = vmatpush1.msra.mxu0 %v229
        %253 = vmatprep.subr.mxu0 %v233
        %254 = vmatpush1.msra.mxu0 %v232
        %255 = vmatprep.subr.mxu0 %v236
        %256 = vmatpush1.msra.mxu0 %v235
        %257 = vmatprep.subr.mxu0 0.0
        %258 = vmatpush1.msra.mxu0 0.0
        %259 = vmatprep.subr.mxu0 0.0
        %260 = vmatpush1.msra.mxu0 0.0
        %261 = vmatprep.subr.mxu0 0.0
        %262 = vmatpush1.msra.mxu0 0.0
        %263 = vmatprep.subr.mxu0 0.0
        %264 = vmatpush1.msra.mxu0 0.0
        %265 = vmatprep.subr.mxu0 0.0
        %266 = vmatpush1.msra.mxu0 0.0
        %267 = vmatprep.subr.mxu0 0.0
        %268 = vmatpush1.msra.mxu0 0.0
        %269 = vmatprep.subr.mxu0 0.0
        %270 = vmatpush1.msra.mxu0 0.0
        %271 = vmatprep.subr.mxu0 0.0
        %272 = vmatpush1.msra.mxu0 0.0
        %273 = vmatprep.subr.mxu0 0.0
        %274 = vmatpush1.msra.mxu0 0.0
        %275 = vmatprep.subr.mxu0 0.0
        %276 = vmatpush1.msra.mxu0 0.0
        %277 = vmatprep.subr.mxu0 0.0
        %278 = vmatpush1.msra.mxu0 0.0
        %279 = vmatprep.subr.mxu0 0.0
        %280 = vmatpush1.msra.mxu0 0.0
        %281 = vmatprep.subr.mxu0 0.0
        %282 = vmatpush1.msra.mxu0 0.0
        %283 = vmatprep.subr.mxu0 0.0
        %284 = vmatpush1.msra.mxu0 0.0
        %285 = vmatprep.subr.mxu0 0.0
        %286 = vmatpush1.msra.mxu0 0.0
        %287 = vmatprep.subr.mxu0 0.0
        %288 = vmatpush1.msra.mxu0 0.0
        %289 = vmatprep.subr.mxu0 0.0
        %290 = vmatpush1.msra.mxu0 0.0
        %291 = vmatprep.subr.mxu0 0.0
        %292 = vmatpush1.msra.mxu0 0.0
        %293 = vmatprep.subr.mxu0 0.0
        %294 = vmatpush1.msra.mxu0 0.0
        %295 = vmatprep.subr.mxu0 0.0
        %296 = vmatpush1.msra.mxu0 0.0
        %297 = vmatprep.subr.mxu0 0.0
        %298 = vmatpush1.msra.mxu0 0.0
        %299 = vmatprep.subr.mxu0 0.0
        %300 = vmatpush1.msra.mxu0 0.0
        %301 = vmatprep.subr.mxu0 0.0
        %302 = vmatpush1.msra.mxu0 0.0
        %303 = vmatprep.subr.mxu0 0.0
        %304 = vmatpush1.msra.mxu0 0.0
        %305 = vmatprep.subr.mxu0 0.0
        %306 = vmatpush1.msra.mxu0 0.0
        %307 = vmatprep.subr.mxu0 0.0
        %308 = vmatpush1.msra.mxu0 0.0
        %309 = vmatprep.mubr.f32.mxu0 0.0
        %310 = vmatmul.mubr.f32.gmra.mrb[0].mxu0 %v240
        %v311 = vpop.f32.mrb[0].mxu0
        %v312 = vadd.f32 0.0, %v311
        %v313 = vpop.f32.mrb[0].mxu0
        %v314 = vadd.f32 0.0, %v313
        %315 = vmatprep.mubr.f32.mxu0 0.0
        %316 = vmatmul.mubr.f32.gmra.mrb[0].mxu0 %v243
        %v317 = vpop.f32.mrb[0].mxu0
        %v318 = vadd.f32 0.0, %v317
        %v319 = vpop.f32.mrb[0].mxu0
        %v320 = vadd.f32 0.0, %v319
        %321 = vdwg.mxu0
        %322 = vmatprep.subr.mxu0 0.0
        %323 = vmatpush1.msra.mxu0 %v222
        %324 = vmatprep.subr.mxu0 0.0
        %325 = vmatpush1.msra.mxu0 %v225
        %326 = vmatprep.subr.mxu0 0.0
        %327 = vmatpush1.msra.mxu0 %v228
        %328 = vmatprep.subr.mxu0 0.0
        %329 = vmatpush1.msra.mxu0 %v231
        %330 = vmatprep.subr.mxu0 0.0
        %331 = vmatpush1.msra.mxu0 %v234
        %332 = vmatprep.subr.mxu0 0.0
        %333 = vmatpush1.msra.mxu0 %v237
        %334 = vmatprep.subr.mxu0 0.0
        %335 = vmatpush1.msra.mxu0 0.0
        %336 = vmatprep.subr.mxu0 0.0
        %337 = vmatpush1.msra.mxu0 0.0
        %338 = vmatprep.subr.mxu0 0.0
        %339 = vmatpush1.msra.mxu0 0.0
        %340 = vmatprep.subr.mxu0 0.0
        %341 = vmatpush1.msra.mxu0 0.0
        %342 = vmatprep.subr.mxu0 0.0
        %343 = vmatpush1.msra.mxu0 0.0
        %344 = vmatprep.subr.mxu0 0.0
        %345 = vmatpush1.msra.mxu0 0.0
        %346 = vmatprep.subr.mxu0 0.0
        %347 = vmatpush1.msra.mxu0 0.0
        %348 = vmatprep.subr.mxu0 0.0
        %349 = vmatpush1.msra.mxu0 0.0
        %350 = vmatprep.subr.mxu0 0.0
        %351 = vmatpush1.msra.mxu0 0.0
        %352 = vmatprep.subr.mxu0 0.0
        %353 = vmatpush1.msra.mxu0 0.0
        %354 = vmatprep.subr.mxu0 0.0
        %355 = vmatpush1.msra.mxu0 0.0
        %356 = vmatprep.subr.mxu0 0.0
        %357 = vmatpush1.msra.mxu0 0.0
        %358 = vmatprep.subr.mxu0 0.0
        %359 = vmatpush1.msra.mxu0 0.0
        %360 = vmatprep.subr.mxu0 0.0
        %361 = vmatpush1.msra.mxu0 0.0
        %362 = vmatprep.subr.mxu0 0.0
        %363 = vmatpush1.msra.mxu0 0.0
        %364 = vmatprep.subr.mxu0 0.0
        %365 = vmatpush1.msra.mxu0 0.0
        %366 = vmatprep.subr.mxu0 0.0
        %367 = vmatpush1.msra.mxu0 0.0
        %368 = vmatprep.subr.mxu0 0.0
        %369 = vmatpush1.msra.mxu0 0.0
        %370 = vmatprep.subr.mxu0 0.0
        %371 = vmatpush1.msra.mxu0 0.0
        %372 = vmatprep.subr.mxu0 0.0
        %373 = vmatpush1.msra.mxu0 0.0
        %374 = vmatprep.subr.mxu0 0.0
        %375 = vmatpush1.msra.mxu0 0.0
        %376 = vmatprep.subr.mxu0 0.0
        %377 = vmatpush1.msra.mxu0 0.0
        %378 = vmatprep.subr.mxu0 0.0
        %379 = vmatpush1.msra.mxu0 0.0
        %380 = vmatprep.subr.mxu0 0.0
        %381 = vmatpush1.msra.mxu0 0.0
        %382 = vmatprep.subr.mxu0 0.0
        %383 = vmatpush1.msra.mxu0 0.0
        %384 = vmatprep.subr.mxu0 0.0
        %385 = vmatpush1.msra.mxu0 0.0
        %386 = vmatprep.mubr.f32.mxu0 0.0
        %387 = vmatmul.mubr.f32.gmra.mrb[0].mxu0 %v240
        %v388 = vpop.f32.mrb[0].mxu0
        %v389 = vadd.f32 0.0, %v388
        %v390 = vpop.f32.mrb[0].mxu0
        %391 = vmatprep.mubr.f32.mxu0 0.0
        %392 = vmatmul.mubr.f32.gmra.mrb[0].mxu0 %v243
        %v393 = vpop.f32.mrb[0].mxu0
        %v394 = vadd.f32 0.0, %v393
        %v395 = vpop.f32.mrb[0].mxu0
        %396 = vdwg.mxu0
        %v397 = vld [vmem:[#allocation7] sm:$0xff]
        %v398 = vld [vmem:[#allocation7 + $0x8] sm:$0xff]
        %v399 = vld [vmem:[#allocation7 + $0x10] sm:$0x3]
        %vm400 = vcmask 130048
        %v402 = vsel %vm400, %v397, 0
        %v405 = vsel %vm400, %v398, 0
        %v408 = vsel %vm400, %v399, 0
        %410 = vmatprep.subr.mxu0 0.0
        %411 = vmatpush1.msra.mxu0 %v312
        %412 = vmatprep.subr.mxu0 0.0
        %413 = vmatpush1.msra.mxu0 %v318
        %414 = vmatprep.subr.mxu0 0.0
        %415 = vmatpush1.msra.mxu0 0.0
        %416 = vmatprep.subr.mxu0 0.0
        %417 = vmatpush1.msra.mxu0 0.0
        %418 = vmatprep.subr.mxu0 0.0
        %419 = vmatpush1.msra.mxu0 0.0
        %420 = vmatprep.subr.mxu0 0.0
        %421 = vmatpush1.msra.mxu0 0.0
        %422 = vmatprep.subr.mxu0 0.0
        %423 = vmatpush1.msra.mxu0 0.0
        %424 = vmatprep.subr.mxu0 0.0
        %425 = vmatpush1.msra.mxu0 0.0
        %426 = vmatprep.subr.mxu0 0.0
        %427 = vmatpush1.msra.mxu0 0.0
        %428 = vmatprep.subr.mxu0 0.0
        %429 = vmatpush1.msra.mxu0 0.0
        %430 = vmatprep.subr.mxu0 0.0
        %431 = vmatpush1.msra.mxu0 0.0
        %432 = vmatprep.subr.mxu0 0.0
        %433 = vmatpush1.msra.mxu0 0.0
        %434 = vmatprep.subr.mxu0 0.0
        %435 = vmatpush1.msra.mxu0 0.0
        %436 = vmatprep.subr.mxu0 0.0
        %437 = vmatpush1.msra.mxu0 0.0
        %438 = vmatprep.subr.mxu0 0.0
        %439 = vmatpush1.msra.mxu0 0.0
        %440 = vmatprep.subr.mxu0 0.0
        %441 = vmatpush1.msra.mxu0 0.0
        %442 = vmatprep.subr.mxu0 0.0
        %443 = vmatpush1.msra.mxu0 0.0
        %444 = vmatprep.subr.mxu0 0.0
        %445 = vmatpush1.msra.mxu0 0.0
        %446 = vmatprep.subr.mxu0 0.0
        %447 = vmatpush1.msra.mxu0 0.0
        %448 = vmatprep.subr.mxu0 0.0
        %449 = vmatpush1.msra.mxu0 0.0
        %450 = vmatprep.subr.mxu0 0.0
        %451 = vmatpush1.msra.mxu0 0.0
        %452 = vmatprep.subr.mxu0 0.0
        %453 = vmatpush1.msra.mxu0 0.0
        %454 = vmatprep.subr.mxu0 0.0
        %455 = vmatpush1.msra.mxu0 0.0
        %456 = vmatprep.subr.mxu0 0.0
        %457 = vmatpush1.msra.mxu0 0.0
        %458 = vmatprep.subr.mxu0 0.0
        %459 = vmatpush1.msra.mxu0 0.0
        %460 = vmatprep.subr.mxu0 0.0
        %461 = vmatpush1.msra.mxu0 0.0
        %462 = vmatprep.subr.mxu0 0.0
        %463 = vmatpush1.msra.mxu0 0.0
        %464 = vmatprep.subr.mxu0 0.0
        %465 = vmatpush1.msra.mxu0 0.0
        %466 = vmatprep.subr.mxu0 0.0
        %467 = vmatpush1.msra.mxu0 0.0
        %468 = vmatprep.subr.mxu0 0.0
        %469 = vmatpush1.msra.mxu0 0.0
        %470 = vmatprep.subr.mxu0 0.0
        %471 = vmatpush1.msra.mxu0 0.0
        %472 = vmatprep.subr.mxu0 0.0
        %473 = vmatpush1.msra.mxu0 0.0
        %474 = vmatprep.mubr.f32.mxu0 0.0
        %475 = vmatmul.mubr.f32.gmra.mrb[0].mxu0 %v402
        %v476 = vpop.f32.mrb[0].mxu0
        %v477 = vadd.f32 -2.117808, %v476
        %v478 = vpop.f32.mrb[0].mxu0
        %479 = vmatprep.mubr.f32.mxu0 0.0
        %480 = vmatmul.mubr.f32.gmra.mrb[0].mxu0 %v405
        %v481 = vpop.f32.mrb[0].mxu0
        %v482 = vadd.f32 -2.117808, %v481
        %v483 = vpop.f32.mrb[0].mxu0
        %484 = vmatprep.mubr.f32.mxu0 0.0
        %485 = vmatmul.mubr.f32.gmra.mrb[0].mxu0 %v408
        %v486 = vpop.f32.mrb[0].mxu0
        %v487 = vadd.f32 -2.117808, %v486
        %v488 = vpop.f32.mrb[0].mxu0
        %489 = vdwg.mxu0
        %490 = vst [vmem:[%s217] sm:$0xff] %v477
        %491 = vst [vmem:[%s217 + $0x8] sm:$0xff] %v482
        %492 = vst [vmem:[%s217 + $0x10] sm:$0x3] %v487
        %493 = vmatprep.subr.mxu0 0.0
        %494 = vmatpush1.msra.mxu0 %v314
        %495 = vmatprep.subr.mxu0 0.0
        %496 = vmatpush1.msra.mxu0 %v320
        %497 = vmatprep.subr.mxu0 0.0
        %498 = vmatpush1.msra.mxu0 0.0
        %499 = vmatprep.subr.mxu0 0.0
        %500 = vmatpush1.msra.mxu0 0.0
        %501 = vmatprep.subr.mxu0 0.0
        %502 = vmatpush1.msra.mxu0 0.0
        %503 = vmatprep.subr.mxu0 0.0
        %504 = vmatpush1.msra.mxu0 0.0
        %505 = vmatprep.subr.mxu0 0.0
        %506 = vmatpush1.msra.mxu0 0.0
        %507 = vmatprep.subr.mxu0 0.0
        %508 = vmatpush1.msra.mxu0 0.0
        %509 = vmatprep.subr.mxu0 0.0
        %510 = vmatpush1.msra.mxu0 0.0
        %511 = vmatprep.subr.mxu0 0.0
        %512 = vmatpush1.msra.mxu0 0.0
        %513 = vmatprep.subr.mxu0 0.0
        %514 = vmatpush1.msra.mxu0 0.0
        %515 = vmatprep.subr.mxu0 0.0
        %516 = vmatpush1.msra.mxu0 0.0
        %517 = vmatprep.subr.mxu0 0.0
        %518 = vmatpush1.msra.mxu0 0.0
        %519 = vmatprep.subr.mxu0 0.0
        %520 = vmatpush1.msra.mxu0 0.0
        %521 = vmatprep.subr.mxu0 0.0
        %522 = vmatpush1.msra.mxu0 0.0
        %523 = vmatprep.subr.mxu0 0.0
        %524 = vmatpush1.msra.mxu0 0.0
        %525 = vmatprep.subr.mxu0 0.0
        %526 = vmatpush1.msra.mxu0 0.0
        %527 = vmatprep.subr.mxu0 0.0
        %528 = vmatpush1.msra.mxu0 0.0
        %529 = vmatprep.subr.mxu0 0.0
        %530 = vmatpush1.msra.mxu0 0.0
        %531 = vmatprep.subr.mxu0 0.0
        %532 = vmatpush1.msra.mxu0 0.0
        %533 = vmatprep.subr.mxu0 0.0
        %534 = vmatpush1.msra.mxu0 0.0
        %535 = vmatprep.subr.mxu0 0.0
        %536 = vmatpush1.msra.mxu0 0.0
        %537 = vmatprep.subr.mxu0 0.0
        %538 = vmatpush1.msra.mxu0 0.0
        %539 = vmatprep.subr.mxu0 0.0
        %540 = vmatpush1.msra.mxu0 0.0
        %541 = vmatprep.subr.mxu0 0.0
        %542 = vmatpush1.msra.mxu0 0.0
        %543 = vmatprep.subr.mxu0 0.0
        %544 = vmatpush1.msra.mxu0 0.0
        %545 = vmatprep.subr.mxu0 0.0
        %546 = vmatpush1.msra.mxu0 0.0
        %547 = vmatprep.subr.mxu0 0.0
        %548 = vmatpush1.msra.mxu0 0.0
        %549 = vmatprep.subr.mxu0 0.0
        %550 = vmatpush1.msra.mxu0 0.0
        %551 = vmatprep.subr.mxu0 0.0
        %552 = vmatpush1.msra.mxu0 0.0
        %553 = vmatprep.subr.mxu0 0.0
        %554 = vmatpush1.msra.mxu0 0.0
        %555 = vmatprep.subr.mxu0 0.0
        %556 = vmatpush1.msra.mxu0 0.0
        %557 = vmatprep.mubr.f32.mxu0 0.0
        %558 = vmatmul.mubr.f32.gmra.mrb[0].mxu0 %v402
        %v559 = vpop.f32.mrb[0].mxu0
        %v560 = vadd.f32 -2.0444677, %v559
        %v561 = vpop.f32.mrb[0].mxu0
        %562 = vmatprep.mubr.f32.mxu0 0.0
        %563 = vmatmul.mubr.f32.gmra.mrb[0].mxu0 %v405
        %v564 = vpop.f32.mrb[0].mxu0
        %v565 = vadd.f32 -2.0444677, %v564
        %v566 = vpop.f32.mrb[0].mxu0
        %567 = vmatprep.mubr.f32.mxu0 0.0
        %568 = vmatmul.mubr.f32.gmra.mrb[0].mxu0 %v408
        %v569 = vpop.f32.mrb[0].mxu0
        %v570 = vadd.f32 -2.0444677, %v569
        %v571 = vpop.f32.mrb[0].mxu0
        %572 = vdwg.mxu0
        %s573 = scalar_lea.vmem %s217, 24 [#allocation8]
        %574 = vst [vmem:[%s573] sm:$0xff] %v560
        %575 = vst [vmem:[%s573 + $0x8] sm:$0xff] %v565
        %576 = vst [vmem:[%s573 + $0x10] sm:$0x3] %v570
        %577 = vmatprep.subr.mxu0 0.0
        %578 = vmatpush1.msra.mxu0 %v389
        %579 = vmatprep.subr.mxu0 0.0
        %580 = vmatpush1.msra.mxu0 %v394
        %581 = vmatprep.subr.mxu0 0.0
        %582 = vmatpush1.msra.mxu0 0.0
        %583 = vmatprep.subr.mxu0 0.0
        %584 = vmatpush1.msra.mxu0 0.0
        %585 = vmatprep.subr.mxu0 0.0
        %586 = vmatpush1.msra.mxu0 0.0
        %587 = vmatprep.subr.mxu0 0.0
        %588 = vmatpush1.msra.mxu0 0.0
        %589 = vmatprep.subr.mxu0 0.0
        %590 = vmatpush1.msra.mxu0 0.0
        %591 = vmatprep.subr.mxu0 0.0
        %592 = vmatpush1.msra.mxu0 0.0
        %593 = vmatprep.subr.mxu0 0.0
        %594 = vmatpush1.msra.mxu0 0.0
        %595 = vmatprep.subr.mxu0 0.0
        %596 = vmatpush1.msra.mxu0 0.0
        %597 = vmatprep.subr.mxu0 0.0
        %598 = vmatpush1.msra.mxu0 0.0
        %599 = vmatprep.subr.mxu0 0.0
        %600 = vmatpush1.msra.mxu0 0.0
        %601 = vmatprep.subr.mxu0 0.0
        %602 = vmatpush1.msra.mxu0 0.0
        %603 = vmatprep.subr.mxu0 0.0
        %604 = vmatpush1.msra.mxu0 0.0
        %605 = vmatprep.subr.mxu0 0.0
        %606 = vmatpush1.msra.mxu0 0.0
        %607 = vmatprep.subr.mxu0 0.0
        %608 = vmatpush1.msra.mxu0 0.0
        %609 = vmatprep.subr.mxu0 0.0
        %610 = vmatpush1.msra.mxu0 0.0
        %611 = vmatprep.subr.mxu0 0.0
        %612 = vmatpush1.msra.mxu0 0.0
        %613 = vmatprep.subr.mxu0 0.0
        %614 = vmatpush1.msra.mxu0 0.0
        %615 = vmatprep.subr.mxu0 0.0
        %616 = vmatpush1.msra.mxu0 0.0
        %617 = vmatprep.subr.mxu0 0.0
        %618 = vmatpush1.msra.mxu0 0.0
        %619 = vmatprep.subr.mxu0 0.0
        %620 = vmatpush1.msra.mxu0 0.0
        %621 = vmatprep.subr.mxu0 0.0
        %622 = vmatpush1.msra.mxu0 0.0
        %623 = vmatprep.subr.mxu0 0.0
        %624 = vmatpush1.msra.mxu0 0.0
        %625 = vmatprep.subr.mxu0 0.0
        %626 = vmatpush1.msra.mxu0 0.0
        %627 = vmatprep.subr.mxu0 0.0
        %628 = vmatpush1.msra.mxu0 0.0
        %629 = vmatprep.subr.mxu0 0.0
        %630 = vmatpush1.msra.mxu0 0.0
        %631 = vmatprep.subr.mxu0 0.0
        %632 = vmatpush1.msra.mxu0 0.0
        %633 = vmatprep.subr.mxu0 0.0
        %634 = vmatpush1.msra.mxu0 0.0
        %635 = vmatprep.subr.mxu0 0.0
        %636 = vmatpush1.msra.mxu0 0.0
        %637 = vmatprep.subr.mxu0 0.0
        %638 = vmatpush1.msra.mxu0 0.0
        %639 = vmatprep.subr.mxu0 0.0
        %640 = vmatpush1.msra.mxu0 0.0
        %641 = vmatprep.mubr.f32.mxu0 0.0
        %642 = vmatmul.mubr.f32.gmra.mrb[0].mxu0 %v402
        %v643 = vpop.f32.mrb[0].mxu0
        %v644 = vadd.f32 -1.8114326, %v643
        %v645 = vpop.f32.mrb[0].mxu0
        %646 = vmatprep.mubr.f32.mxu0 0.0
        %647 = vmatmul.mubr.f32.gmra.mrb[0].mxu0 %v405
        %v648 = vpop.f32.mrb[0].mxu0
        %v649 = vadd.f32 -1.8114326, %v648
        %v650 = vpop.f32.mrb[0].mxu0
        %651 = vmatprep.mubr.f32.mxu0 0.0
        %652 = vmatmul.mubr.f32.gmra.mrb[0].mxu0 %v408
        %v653 = vpop.f32.mrb[0].mxu0
        %v654 = vadd.f32 -1.8114326, %v653
        %v655 = vpop.f32.mrb[0].mxu0
        %656 = vdwg.mxu0
        %s657 = scalar_lea.vmem %s217, 48 [#allocation8]
        %658 = vst [vmem:[%s657] sm:$0xff] %v644
        %659 = vst [vmem:[%s657 + $0x8] sm:$0xff] %v649
        %660 = vst [vmem:[%s657 + $0x10] sm:$0x3] %v654
        %s661 = sand.u32 %s97, 1
        %s662 = scalar_lea.sflag [#allocation4], %s661
        %s663 = sand.u32 %s97, 1
        %s664 = smul.addr %s663, 72
        %s665 = scalar_lea.vmem [#allocation8], %s664
        // Predicated region
        $region45: #{tpu_custom_call.1} parent=31 // pred_check
          %p666 = pneg %p107
        $region46: #{tpu_custom_call.1} parent=31 // pred_check_branch
          %668 = sbr.rel (%p666) target = $region48
        $region47: #{tpu_custom_call.1} parent=31 // pred_region
          %s670 = ssub.s32 1152, 1152
          %671 = vsyncadd %s662, %s670
          %s672 = smul.addr %s21, 9
          %s673 = smul.addr %s672, 128
          %s674 = scalar_lea.hbm %s3, %s673
          %s675 = sshll.u32 %s665, 4
          %s676 = int_to_ptr.vmem [resolvable:$true] %s675
          %681 = dma.vmem_to_hbm [thread:$0]  %s676, 1152, %s674, %s662, 128, 128, 8
        $region48: #{tpu_custom_call.1} parent=31 // pred_fallthru
          _
      $region32: #{tpu_custom_call.1} parent=5 // pred_fallthru
        _
      %p682 = scmp.le.s32.totalorder 2, %s16
      // Predicated region
      $region49: #{tpu_custom_call.1} parent=5 // pred_check
        %p683 = pneg %p682
      $region50: #{tpu_custom_call.1} parent=5 // pred_check_branch
        %685 = sbr.rel (%p683) target = $region52
      $region51: #{tpu_custom_call.1} parent=5 // pred_region
        %s686 = ssub.s32 %s16, 2
        // Predicated region
        $region53: #{tpu_custom_call.1} parent=51 // pred_check
          %p687 = pneg %p113
        $region54: #{tpu_custom_call.1} parent=51 // pred_check_branch
          %689 = sbr.rel (%p687) target = $region56
        $region55: #{tpu_custom_call.1} parent=51 // pred_region
          %s690 = sand.u32 %s98, 1
          %s691 = scalar_lea.sflag [#allocation4], %s690
          %s692 = sand.u32 %s98, 1
          %s693 = smul.addr %s692, 72
          %s694 = scalar_lea.vmem [#allocation8], %s693
          %695 = dma.done %s691, 1152
        $region56: #{tpu_custom_call.1} parent=51 // pred_fallthru
          _
      $region52: #{tpu_custom_call.1} parent=5 // pred_fallthru
        _
    $region6: #{tpu_custom_call.1} parent=1 // loop_footer
      %s20 = sadd.s32 1, %s16
    $region7: #{tpu_custom_call.1} parent=1 // loop_footer_branch
      %15 = sbr.rel target = $region3
    $region8: #{tpu_custom_call.1} parent=1 // loop_exit
      _
    %696 = vsyncpa [#allocation3], 1
    %s697 = scalar_lea.sflag [#allocation3], 1
    %698 = vsyncpa %s697, 1
    %699 = vsyncpa [#allocation6], 1
    %700 = vsyncpa [#allocation4], 1
    %s701 = scalar_lea.sflag [#allocation4], 1
    %702 = vsyncpa %s701, 1

</llo_original>
